<compile_context>
chip_gen: v7x
topology: tpu7x:2x2x1
jax: 0.10.0
libtpu: 0.0.40
codegen_flags: <defaults>
</compile_context>

<pallas_src>
import functools

import jax
import jax.numpy as jnp
import numpy as np
from jax.experimental import pallas as pl
from jax.experimental.pallas import tpu as pltpu

NUM_CLASSES = 7
# Deterministic "parameters" from compute_losses.__init__ (CE class weights).
CLASS_WEIGHTS = (3.17794119, 2.5617616, 23.64493676, 7.09298426,
                 45.14709186, 18.77214296, 48.18801878)
CLASS_WEIGHTS_ARR = jnp.array(CLASS_WEIGHTS, dtype=jnp.float32)
DICE_EPS = 1e-7   # smp soft_dice_score default eps (smooth = 0.0)
LANES = 128


def _loss_stats_kernel(logits_ref, labels_ref,
                       inter_out, sump_out, pres_out, num_out,
                       *, hw, tile_n, needs_mask):
    """Accumulates CE + dice sufficient statistics for one (batch, HW-tile).

    logits_ref: (C, TN) native dtype     labels_ref: (1, TN) int32
    resident outputs (accumulated across the HW axis, written back per batch):
      inter_out/sump_out/pres_out: (C, 128) lane-wide partial sums
      num_out:                     (1, 128) lane-wide partial sums
    """
    i = pl.program_id(1)

    @pl.when(i == 0)
    def _():
        inter_out[...] = jnp.zeros_like(inter_out)
        sump_out[...] = jnp.zeros_like(sump_out)
        pres_out[...] = jnp.zeros_like(pres_out)
        num_out[...] = jnp.zeros_like(num_out)

    x = logits_ref[...].astype(jnp.float32)            # (C, TN)
    lab = labels_ref[...]                               # (1, TN) int32
    c, tn = x.shape

    if needs_mask:
        col = jax.lax.broadcasted_iota(jnp.int32, (1, tn), 1) + i * tile_n
        valid_b = col < hw                               # (1, TN) bool
        valid = valid_b.astype(jnp.float32)
        # Replace padded/garbage lanes with 0 logits so softmax stays finite.
        x = jnp.where(valid_b, x, 0.0)
    else:
        valid = None

    cls_ids = jax.lax.broadcasted_iota(jnp.int32, (c, tn), 0)
    eq = cls_ids == lab
    onehot = jnp.where(eq, valid, 0.0) if needs_mask else eq.astype(jnp.float32)

    # softmax over the class (sublane) axis; CE in scalar form (no full logp).
    m = jnp.max(x, axis=0, keepdims=True)                # (1, TN)
    e = jnp.exp(x - m)                                   # (C, TN)
    s = jnp.sum(e, axis=0, keepdims=True)                # (1, TN)
    p = e * pl.reciprocal(s, approx=False)               # softmax probs
    lse = m + jnp.log(s)                                 # logsumexp
    x_true = jnp.sum(onehot * x, axis=0, keepdims=True)  # logit of true class

    # Per-pixel class weight (weights baked in as splat constants).
    w_pix = jnp.where(lab == 0, CLASS_WEIGHTS[0], 0.0)
    for cidx in range(1, NUM_CLASSES):
        w_pix = w_pix + jnp.where(lab == cidx, CLASS_WEIGHTS[cidx], 0.0)
    if needs_mask:
        w_pix = w_pix * valid
        p = p * valid

    num_t = w_pix * (lse - x_true)                       # w[y]*nll per pixel
    inter_t = p * onehot                                 # dice intersection

    # Fold the tile to 128-lane partials with elementwise (VPU) adds only;
    # the cross-lane reduction happens once in the JAX glue.
    nb = tn // LANES

    def fold(t):
        r = t[:, 0:LANES]
        for b in range(1, nb):
            r = r + t[:, b * LANES:(b + 1) * LANES]
        return r

    inter_out[...] += fold(inter_t)
    sump_out[...] += fold(p)
    pres_out[...] += fold(onehot)
    num_out[...] += fold(num_t)


@functools.partial(jax.jit, static_argnames=("dice_weight", "tile_n"))
def compute_losses(outputs, labels, dice_weight=1.0, tile_n=8192):
    """outputs: (B, C, H, W) logits (any float dtype), labels: (B, H, W) int."""
    B, C, H, W = outputs.shape
    assert C == NUM_CLASSES
    HW = H * W

    # Free reshapes only -- no transpose, no host-side dtype cast.
    logits = outputs.reshape(B, C, HW)
    labels_i = labels.reshape(B, 1, HW).astype(jnp.int32)

    if HW < LANES:
        # Tiny-image fallback: pad (cheap, tensors are tiny) to one lane tile.
        pad = LANES - HW
        logits = jnp.pad(logits, ((0, 0), (0, 0), (0, pad)))
        labels_i = jnp.pad(labels_i, ((0, 0), (0, 0), (0, pad)),
                           constant_values=-1)
        HW_a = LANES
    else:
        HW_a = HW

    # Lane tile: multiple of 128, never larger than the (padded) image.
    tn = max(LANES, (int(tile_n) // LANES) * LANES)
    tn = min(tn, (HW_a // LANES) * LANES)
    grid_hw = pl.cdiv(HW_a, tn)
    needs_mask = (grid_hw * tn != HW)

    kernel = functools.partial(_loss_stats_kernel, hw=HW, tile_n=tn,
                               needs_mask=needs_mask)

    out_shapes = (
        jax.ShapeDtypeStruct((B, C, LANES), jnp.float32),  # intersection
        jax.ShapeDtypeStruct((B, C, LANES), jnp.float32),  # sum of probs
        jax.ShapeDtypeStruct((B, C, LANES), jnp.float32),  # class presence
        jax.ShapeDtypeStruct((B, 1, LANES), jnp.float32),  # CE numerator
    )
    cls_out = pl.BlockSpec((None, C, LANES), lambda b, i: (b, 0, 0))
    row_out = pl.BlockSpec((None, 1, LANES), lambda b, i: (b, 0, 0))

    inter_p, sump_p, pres_p, num_p = pl.pallas_call(
        kernel,
        out_shape=out_shapes,
        grid_spec=pltpu.PrefetchScalarGridSpec(
            num_scalar_prefetch=0,
            grid=(B, grid_hw),
            in_specs=[
                pl.BlockSpec((None, C, tn), lambda b, i: (b, 0, i)),
                pl.BlockSpec((None, 1, tn), lambda b, i: (b, 0, i)),
            ],
            out_specs=(cls_out, cls_out, cls_out, row_out),
        ),
        compiler_params=pltpu.CompilerParams(
            dimension_semantics=("parallel", "arbitrary")),
    )(logits, labels_i)

    # ---- cheap finalization (B*C*128 partials + 7 classes) in plain JAX ----
    inter = jnp.sum(inter_p, axis=(0, 2))        # (C,)
    sump = jnp.sum(sump_p, axis=(0, 2))          # (C,)
    pres = jnp.sum(pres_p, axis=(0, 2))          # (C,) pixel count per class
    ce_num = jnp.sum(num_p)
    # CE denominator = sum over pixels of w[y] = dot(weights, class counts).
    ce_den = jnp.dot(CLASS_WEIGHTS_ARR, pres)

    ce_loss = ce_num / ce_den
    card = sump + pres
    dice_score = (2.0 * inter) / jnp.maximum(card, DICE_EPS)
    present = (pres > 0.0).astype(jnp.float32)
    dice_loss = jnp.mean((1.0 - dice_score) * present)

    return ce_loss + dice_weight * dice_loss


def _reference(outputs, labels, dice_weight=1.0):
    """Pure-JAX reference mirroring nn.CrossEntropyLoss(weight) + smp DiceLoss."""
    logits = outputs.astype(jnp.float32)
    logp = jax.nn.log_softmax(logits, axis=1)
    p = jnp.exp(logp)
    onehot = jax.nn.one_hot(labels, NUM_CLASSES, axis=1, dtype=jnp.float32)
    nll = -jnp.sum(onehot * logp, axis=1)
    w_pix = CLASS_WEIGHTS_ARR[labels]
    ce = jnp.sum(w_pix * nll) / jnp.sum(w_pix)
    inter = jnp.sum(p * onehot, axis=(0, 2, 3))
    card = jnp.sum(p + onehot, axis=(0, 2, 3))
    present = jnp.sum(onehot, axis=(0, 2, 3)) > 0
    dice = (2.0 * inter) / jnp.maximum(card, DICE_EPS)
    dl = jnp.mean((1.0 - dice) * present.astype(jnp.float32))
    return ce + dice_weight * dl


if __name__ == "__main__":
    key = jax.random.PRNGKey(0)
    k1, k2, k3, k4 = jax.random.split(key, 4)

    # Primary small case (H*W is a multiple of 128 -> exact lane tiling).
    B, C, H, W = 2, NUM_CLASSES, 16, 16
    outputs = jax.random.normal(k1, (B, C, H, W), dtype=jnp.float32)
    labels = jax.random.randint(k2, (B, H, W), 0, NUM_CLASSES, dtype=jnp.int32)
    loss = jax.block_until_ready(compute_losses(outputs, labels, dice_weight=1.0))
    ref = jax.block_until_ready(_reference(outputs, labels, dice_weight=1.0))
    np.testing.assert_allclose(np.asarray(loss), np.asarray(ref),
                               rtol=1e-3, atol=1e-4)

    # Ragged case (H*W = 320 not a multiple of the tile -> in-kernel masking).
    B2, H2, W2 = 2, 16, 20
    outputs2 = jax.random.normal(k3, (B2, NUM_CLASSES, H2, W2), dtype=jnp.float32)
    labels2 = jax.random.randint(k4, (B2, H2, W2), 0, NUM_CLASSES, dtype=jnp.int32)
    loss2 = jax.block_until_ready(compute_losses(outputs2, labels2, dice_weight=1.0))
    ref2 = jax.block_until_ready(_reference(outputs2, labels2, dice_weight=1.0))
    np.testing.assert_allclose(np.asarray(loss2), np.asarray(ref2),
                               rtol=1e-3, atol=1e-4)

    print("KERNEL_OK")
</pallas_src>

<mosaic_0001>
module attributes {stable_mosaic.version = 11 : i64} {
  func.func @_loss_stats_kernel(%arg0: i32, %arg1: i32, %arg2: memref<1x7x256xf32, #tpu.memory_space<vmem>>, %arg3: memref<1x1x256xi32, #tpu.memory_space<vmem>>, %arg4: memref<1x7x128xf32, #tpu.memory_space<vmem>>, %arg5: memref<1x7x128xf32, #tpu.memory_space<vmem>>, %arg6: memref<1x7x128xf32, #tpu.memory_space<vmem>>, %arg7: memref<1x1x128xf32, #tpu.memory_space<vmem>>) attributes {dimension_semantics = [#tpu.dimension_semantics<parallel>, #tpu.dimension_semantics<arbitrary>], iteration_bounds = array<i64: 2, 1>, scalar_prefetch = 0 : i64, scratch_operands = 0 : i64, tpu.core_type = #tpu.core_type<tc>, window_params = [{transform_indices = @transform_0, window_bounds = array<i64: 1, 7, 256>}, {transform_indices = @transform_1, window_bounds = array<i64: 1, 1, 256>}, {transform_indices = @transform_2, window_bounds = array<i64: 1, 7, 128>}, {transform_indices = @transform_3, window_bounds = array<i64: 1, 7, 128>}, {transform_indices = @transform_4, window_bounds = array<i64: 1, 7, 128>}, {transform_indices = @transform_5, window_bounds = array<i64: 1, 1, 128>}]} {
    %c0_i32 = arith.constant 0 : i32
    %0 = arith.cmpi eq, %arg1, %c0_i32 : i32
    %1 = arith.extui %0 : i1 to i32
    %c0_i32_0 = arith.constant 0 : i32
    %2 = arith.cmpi ne, %1, %c0_i32_0 : i32
    scf.if %2 {
      %cst_47 = arith.constant 0.000000e+00 : f32
      %107 = vector.broadcast %cst_47 : f32 to vector<7x128xf32>
      %c0_48 = arith.constant 0 : index
      %c0_49 = arith.constant 0 : index
      %c0_50 = arith.constant 0 : index
      %108 = vector.load %arg4[%c0_48, %c0_49, %c0_50] : memref<1x7x128xf32, #tpu.memory_space<vmem>>, vector<1x7x128xf32>
      %109 = vector.shape_cast %108 : vector<1x7x128xf32> to vector<7x128xf32>
      %110 = vector.shape_cast %107 : vector<7x128xf32> to vector<1x7x128xf32>
      tpu.vector_store %arg4[%c0_48, %c0_49, %c0_50], %110 {strides = array<i32>} : memref<1x7x128xf32, #tpu.memory_space<vmem>>, vector<1x7x128xf32>,
      %cst_51 = arith.constant 0.000000e+00 : f32
      %111 = vector.broadcast %cst_51 : f32 to vector<7x128xf32>
      %c0_52 = arith.constant 0 : index
      %c0_53 = arith.constant 0 : index
      %c0_54 = arith.constant 0 : index
      %112 = vector.load %arg5[%c0_52, %c0_53, %c0_54] : memref<1x7x128xf32, #tpu.memory_space<vmem>>, vector<1x7x128xf32>
      %113 = vector.shape_cast %112 : vector<1x7x128xf32> to vector<7x128xf32>
      %114 = vector.shape_cast %111 : vector<7x128xf32> to vector<1x7x128xf32>
      tpu.vector_store %arg5[%c0_52, %c0_53, %c0_54], %114 {strides = array<i32>} : memref<1x7x128xf32, #tpu.memory_space<vmem>>, vector<1x7x128xf32>,
      %cst_55 = arith.constant 0.000000e+00 : f32
      %115 = vector.broadcast %cst_55 : f32 to vector<7x128xf32>
      %c0_56 = arith.constant 0 : index
      %c0_57 = arith.constant 0 : index
      %c0_58 = arith.constant 0 : index
      %116 = vector.load %arg6[%c0_56, %c0_57, %c0_58] : memref<1x7x128xf32, #tpu.memory_space<vmem>>, vector<1x7x128xf32>
      %117 = vector.shape_cast %116 : vector<1x7x128xf32> to vector<7x128xf32>
      %118 = vector.shape_cast %115 : vector<7x128xf32> to vector<1x7x128xf32>
      tpu.vector_store %arg6[%c0_56, %c0_57, %c0_58], %118 {strides = array<i32>} : memref<1x7x128xf32, #tpu.memory_space<vmem>>, vector<1x7x128xf32>,
      %cst_59 = arith.constant 0.000000e+00 : f32
      %119 = vector.broadcast %cst_59 : f32 to vector<1x128xf32>
      %c0_60 = arith.constant 0 : index
      %c0_61 = arith.constant 0 : index
      %c0_62 = arith.constant 0 : index
      %120 = vector.load %arg7[%c0_60, %c0_61, %c0_62] : memref<1x1x128xf32, #tpu.memory_space<vmem>>, vector<1x1x128xf32>
      %121 = vector.shape_cast %120 : vector<1x1x128xf32> to vector<1x128xf32>
      %122 = vector.shape_cast %119 : vector<1x128xf32> to vector<1x1x128xf32>
      tpu.vector_store %arg7[%c0_60, %c0_61, %c0_62], %122 {strides = array<i32>} : memref<1x1x128xf32, #tpu.memory_space<vmem>>, vector<1x1x128xf32>,
    } else {
    }
    %c0 = arith.constant 0 : index
    %c0_1 = arith.constant 0 : index
    %c0_2 = arith.constant 0 : index
    %3 = vector.load %arg2[%c0, %c0_1, %c0_2] : memref<1x7x256xf32, #tpu.memory_space<vmem>>, vector<1x7x256xf32>
    %4 = vector.shape_cast %3 : vector<1x7x256xf32> to vector<7x256xf32>
    %c0_3 = arith.constant 0 : index
    %c0_4 = arith.constant 0 : index
    %c0_5 = arith.constant 0 : index
    %5 = vector.load %arg3[%c0_3, %c0_4, %c0_5] : memref<1x1x256xi32, #tpu.memory_space<vmem>>, vector<1x1x256xi32>
    %6 = vector.shape_cast %5 : vector<1x1x256xi32> to vector<1x256xi32>
    %7 = tpu.iota {dimensions = array<i32: 0>} : vector<7x256xi32>
    %8 = vector.broadcast %6 : vector<1x256xi32> to vector<7x256xi32>
    %9 = arith.cmpi eq, %7, %8 : vector<7x256xi32>
    %10 = arith.extui %9 : vector<7x256xi1> to vector<7x256xi32>
    %11 = arith.sitofp %10 : vector<7x256xi32> to vector<7x256xf32>
    %cst = arith.constant dense<0xFF800000> : vector<256xf32>
    %12 = vector.multi_reduction <maximumf>, %4, %cst [0] : vector<7x256xf32> to vector<256xf32>
    %13 = vector.shape_cast %12 : vector<256xf32> to vector<1x256xf32>
    %14 = vector.broadcast %13 : vector<1x256xf32> to vector<7x256xf32>
    %15 = arith.subf %4, %14 : vector<7x256xf32>
    %16 = math.exp %15 : vector<7x256xf32>
    %cst_6 = arith.constant dense<0.000000e+00> : vector<256xf32>
    %17 = vector.multi_reduction <add>, %16, %cst_6 [0] : vector<7x256xf32> to vector<256xf32>
    %18 = vector.shape_cast %17 : vector<256xf32> to vector<1x256xf32>
    %19 = tpu.reciprocal %18 : vector<1x256xf32> -> vector<1x256xf32>
    %20 = vector.broadcast %19 : vector<1x256xf32> to vector<7x256xf32>
    %21 = arith.mulf %16, %20 : vector<7x256xf32>
    %22 = math.log %18 : vector<1x256xf32>
    %23 = arith.addf %13, %22 : vector<1x256xf32>
    %24 = arith.mulf %11, %4 : vector<7x256xf32>
    %cst_7 = arith.constant dense<0.000000e+00> : vector<256xf32>
    %25 = vector.multi_reduction <add>, %24, %cst_7 [0] : vector<7x256xf32> to vector<256xf32>
    %26 = vector.shape_cast %25 : vector<256xf32> to vector<1x256xf32>
    %c0_i32_8 = arith.constant 0 : i32
    %27 = vector.broadcast %c0_i32_8 : i32 to vector<1x256xi32>
    %28 = arith.cmpi eq, %6, %27 : vector<1x256xi32>
    %cst_9 = arith.constant 3.17794108 : f32
    %cst_10 = arith.constant 0.000000e+00 : f32
    %29 = vector.broadcast %cst_9 : f32 to vector<1x256xf32>
    %30 = vector.broadcast %cst_10 : f32 to vector<1x256xf32>
    %31 = arith.select %28, %29, %30 : vector<1x256xi1>, vector<1x256xf32>
    %c1_i32 = arith.constant 1 : i32
    %32 = vector.broadcast %c1_i32 : i32 to vector<1x256xi32>
    %33 = arith.cmpi eq, %6, %32 : vector<1x256xi32>
    %cst_11 = arith.constant 2.56176162 : f32
    %cst_12 = arith.constant 0.000000e+00 : f32
    %34 = vector.broadcast %cst_11 : f32 to vector<1x256xf32>
    %35 = vector.broadcast %cst_12 : f32 to vector<1x256xf32>
    %36 = arith.select %33, %34, %35 : vector<1x256xi1>, vector<1x256xf32>
    %37 = arith.addf %31, %36 : vector<1x256xf32>
    %c2_i32 = arith.constant 2 : i32
    %38 = vector.broadcast %c2_i32 : i32 to vector<1x256xi32>
    %39 = arith.cmpi eq, %6, %38 : vector<1x256xi32>
    %cst_13 = arith.constant 23.6449375 : f32
    %cst_14 = arith.constant 0.000000e+00 : f32
    %40 = vector.broadcast %cst_13 : f32 to vector<1x256xf32>
    %41 = vector.broadcast %cst_14 : f32 to vector<1x256xf32>
    %42 = arith.select %39, %40, %41 : vector<1x256xi1>, vector<1x256xf32>
    %43 = arith.addf %37, %42 : vector<1x256xf32>
    %c3_i32 = arith.constant 3 : i32
    %44 = vector.broadcast %c3_i32 : i32 to vector<1x256xi32>
    %45 = arith.cmpi eq, %6, %44 : vector<1x256xi32>
    %cst_15 = arith.constant 7.09298419 : f32
    %cst_16 = arith.constant 0.000000e+00 : f32
    %46 = vector.broadcast %cst_15 : f32 to vector<1x256xf32>
    %47 = vector.broadcast %cst_16 : f32 to vector<1x256xf32>
    %48 = arith.select %45, %46, %47 : vector<1x256xi1>, vector<1x256xf32>
    %49 = arith.addf %43, %48 : vector<1x256xf32>
    %c4_i32 = arith.constant 4 : i32
    %50 = vector.broadcast %c4_i32 : i32 to vector<1x256xi32>
    %51 = arith.cmpi eq, %6, %50 : vector<1x256xi32>
    %cst_17 = arith.constant 45.1470909 : f32
    %cst_18 = arith.constant 0.000000e+00 : f32
    %52 = vector.broadcast %cst_17 : f32 to vector<1x256xf32>
    %53 = vector.broadcast %cst_18 : f32 to vector<1x256xf32>
    %54 = arith.select %51, %52, %53 : vector<1x256xi1>, vector<1x256xf32>
    %55 = arith.addf %49, %54 : vector<1x256xf32>
    %c5_i32 = arith.constant 5 : i32
    %56 = vector.broadcast %c5_i32 : i32 to vector<1x256xi32>
    %57 = arith.cmpi eq, %6, %56 : vector<1x256xi32>
    %cst_19 = arith.constant 18.7721424 : f32
    %cst_20 = arith.constant 0.000000e+00 : f32
    %58 = vector.broadcast %cst_19 : f32 to vector<1x256xf32>
    %59 = vector.broadcast %cst_20 : f32 to vector<1x256xf32>
    %60 = arith.select %57, %58, %59 : vector<1x256xi1>, vector<1x256xf32>
    %61 = arith.addf %55, %60 : vector<1x256xf32>
    %c6_i32 = arith.constant 6 : i32
    %62 = vector.broadcast %c6_i32 : i32 to vector<1x256xi32>
    %63 = arith.cmpi eq, %6, %62 : vector<1x256xi32>
    %cst_21 = arith.constant 48.1880188 : f32
    %cst_22 = arith.constant 0.000000e+00 : f32
    %64 = vector.broadcast %cst_21 : f32 to vector<1x256xf32>
    %65 = vector.broadcast %cst_22 : f32 to vector<1x256xf32>
    %66 = arith.select %63, %64, %65 : vector<1x256xi1>, vector<1x256xf32>
    %67 = arith.addf %61, %66 : vector<1x256xf32>
    %68 = arith.subf %23, %26 : vector<1x256xf32>
    %69 = arith.mulf %67, %68 : vector<1x256xf32>
    %70 = arith.mulf %21, %11 : vector<7x256xf32>
    %c0_23 = arith.constant 0 : index
    %c0_24 = arith.constant 0 : index
    %c0_25 = arith.constant 0 : index
    %71 = vector.load %arg4[%c0_23, %c0_24, %c0_25] : memref<1x7x128xf32, #tpu.memory_space<vmem>>, vector<1x7x128xf32>
    %72 = vector.shape_cast %71 : vector<1x7x128xf32> to vector<7x128xf32>
    %73 = vector.extract_strided_slice %70 {offsets = [0, 0], sizes = [7, 128], strides = [1, 1]} : vector<7x256xf32> to vector<7x128xf32>
    %74 = vector.extract_strided_slice %70 {offsets = [0, 128], sizes = [7, 128], strides = [1, 1]} : vector<7x256xf32> to vector<7x128xf32>
    %75 = arith.addf %73, %74 : vector<7x128xf32>
    %76 = arith.addf %72, %75 : vector<7x128xf32>
    %c0_26 = arith.constant 0 : index
    %c0_27 = arith.constant 0 : index
    %c0_28 = arith.constant 0 : index
    %77 = vector.load %arg4[%c0_26, %c0_27, %c0_28] : memref<1x7x128xf32, #tpu.memory_space<vmem>>, vector<1x7x128xf32>
    %78 = vector.shape_cast %77 : vector<1x7x128xf32> to vector<7x128xf32>
    %79 = vector.shape_cast %76 : vector<7x128xf32> to vector<1x7x128xf32>
    tpu.vector_store %arg4[%c0_26, %c0_27, %c0_28], %79 {strides = array<i32>} : memref<1x7x128xf32, #tpu.memory_space<vmem>>, vector<1x7x128xf32>,
    %c0_29 = arith.constant 0 : index
    %c0_30 = arith.constant 0 : index
    %c0_31 = arith.constant 0 : index
    %80 = vector.load %arg5[%c0_29, %c0_30, %c0_31] : memref<1x7x128xf32, #tpu.memory_space<vmem>>, vector<1x7x128xf32>
    %81 = vector.shape_cast %80 : vector<1x7x128xf32> to vector<7x128xf32>
    %82 = vector.extract_strided_slice %21 {offsets = [0, 0], sizes = [7, 128], strides = [1, 1]} : vector<7x256xf32> to vector<7x128xf32>
    %83 = vector.extract_strided_slice %21 {offsets = [0, 128], sizes = [7, 128], strides = [1, 1]} : vector<7x256xf32> to vector<7x128xf32>
    %84 = arith.addf %82, %83 : vector<7x128xf32>
    %85 = arith.addf %81, %84 : vector<7x128xf32>
    %c0_32 = arith.constant 0 : index
    %c0_33 = arith.constant 0 : index
    %c0_34 = arith.constant 0 : index
    %86 = vector.load %arg5[%c0_32, %c0_33, %c0_34] : memref<1x7x128xf32, #tpu.memory_space<vmem>>, vector<1x7x128xf32>
    %87 = vector.shape_cast %86 : vector<1x7x128xf32> to vector<7x128xf32>
    %88 = vector.shape_cast %85 : vector<7x128xf32> to vector<1x7x128xf32>
    tpu.vector_store %arg5[%c0_32, %c0_33, %c0_34], %88 {strides = array<i32>} : memref<1x7x128xf32, #tpu.memory_space<vmem>>, vector<1x7x128xf32>,
    %c0_35 = arith.constant 0 : index
    %c0_36 = arith.constant 0 : index
    %c0_37 = arith.constant 0 : index
    %89 = vector.load %arg6[%c0_35, %c0_36, %c0_37] : memref<1x7x128xf32, #tpu.memory_space<vmem>>, vector<1x7x128xf32>
    %90 = vector.shape_cast %89 : vector<1x7x128xf32> to vector<7x128xf32>
    %91 = vector.extract_strided_slice %11 {offsets = [0, 0], sizes = [7, 128], strides = [1, 1]} : vector<7x256xf32> to vector<7x128xf32>
    %92 = vector.extract_strided_slice %11 {offsets = [0, 128], sizes = [7, 128], strides = [1, 1]} : vector<7x256xf32> to vector<7x128xf32>
    %93 = arith.addf %91, %92 : vector<7x128xf32>
    %94 = arith.addf %90, %93 : vector<7x128xf32>
    %c0_38 = arith.constant 0 : index
    %c0_39 = arith.constant 0 : index
    %c0_40 = arith.constant 0 : index
    %95 = vector.load %arg6[%c0_38, %c0_39, %c0_40] : memref<1x7x128xf32, #tpu.memory_space<vmem>>, vector<1x7x128xf32>
    %96 = vector.shape_cast %95 : vector<1x7x128xf32> to vector<7x128xf32>
    %97 = vector.shape_cast %94 : vector<7x128xf32> to vector<1x7x128xf32>
    tpu.vector_store %arg6[%c0_38, %c0_39, %c0_40], %97 {strides = array<i32>} : memref<1x7x128xf32, #tpu.memory_space<vmem>>, vector<1x7x128xf32>,
    %c0_41 = arith.constant 0 : index
    %c0_42 = arith.constant 0 : index
    %c0_43 = arith.constant 0 : index
    %98 = vector.load %arg7[%c0_41, %c0_42, %c0_43] : memref<1x1x128xf32, #tpu.memory_space<vmem>>, vector<1x1x128xf32>
    %99 = vector.shape_cast %98 : vector<1x1x128xf32> to vector<1x128xf32>
    %100 = vector.extract_strided_slice %69 {offsets = [0, 0], sizes = [1, 128], strides = [1, 1]} : vector<1x256xf32> to vector<1x128xf32>
    %101 = vector.extract_strided_slice %69 {offsets = [0, 128], sizes = [1, 128], strides = [1, 1]} : vector<1x256xf32> to vector<1x128xf32>
    %102 = arith.addf %100, %101 : vector<1x128xf32>
    %103 = arith.addf %99, %102 : vector<1x128xf32>
    %c0_44 = arith.constant 0 : index
    %c0_45 = arith.constant 0 : index
    %c0_46 = arith.constant 0 : index
    %104 = vector.load %arg7[%c0_44, %c0_45, %c0_46] : memref<1x1x128xf32, #tpu.memory_space<vmem>>, vector<1x1x128xf32>
    %105 = vector.shape_cast %104 : vector<1x1x128xf32> to vector<1x128xf32>
    %106 = vector.shape_cast %103 : vector<1x128xf32> to vector<1x1x128xf32>
    tpu.vector_store %arg7[%c0_44, %c0_45, %c0_46], %106 {strides = array<i32>} : memref<1x1x128xf32, #tpu.memory_space<vmem>>, vector<1x1x128xf32>,
    return
  }
  func.func @transform_0(%arg0: i32, %arg1: i32) -> (i32, i32, i32) {
    %c0_i32 = arith.constant 0 : i32
    %c0_i32_0 = arith.constant 0 : i32
    return %arg0, %c0_i32, %arg1 : i32, i32, i32
  }
  func.func @transform_1(%arg0: i32, %arg1: i32) -> (i32, i32, i32) {
    %c0_i32 = arith.constant 0 : i32
    %c0_i32_0 = arith.constant 0 : i32
    return %arg0, %c0_i32, %arg1 : i32, i32, i32
  }
  func.func @transform_2(%arg0: i32, %arg1: i32) -> (i32, i32, i32) {
    %c0_i32 = arith.constant 0 : i32
    %c0_i32_0 = arith.constant 0 : i32
    %c0_i32_1 = arith.constant 0 : i32
    return %arg0, %c0_i32, %c0_i32_0 : i32, i32, i32
  }
  func.func @transform_3(%arg0: i32, %arg1: i32) -> (i32, i32, i32) {
    %c0_i32 = arith.constant 0 : i32
    %c0_i32_0 = arith.constant 0 : i32
    %c0_i32_1 = arith.constant 0 : i32
    return %arg0, %c0_i32, %c0_i32_0 : i32, i32, i32
  }
  func.func @transform_4(%arg0: i32, %arg1: i32) -> (i32, i32, i32) {
    %c0_i32 = arith.constant 0 : i32
    %c0_i32_0 = arith.constant 0 : i32
    %c0_i32_1 = arith.constant 0 : i32
    return %arg0, %c0_i32, %c0_i32_0 : i32, i32, i32
  }
  func.func @transform_5(%arg0: i32, %arg1: i32) -> (i32, i32, i32) {
    %c0_i32 = arith.constant 0 : i32
    %c0_i32_0 = arith.constant 0 : i32
    %c0_i32_1 = arith.constant 0 : i32
    return %arg0, %c0_i32, %c0_i32_0 : i32, i32, i32
  }
}

</mosaic_0001>

<llo_original>
// kernel: compute_losses.1
$region0: #{compute_losses.1}
  #allocation0 [shape = 'u32[]', space=smem, size = 0x4, offset = 0x4, fixed_abs, tag = 'smem constant byte address 0x4 - core index']
  #allocation1 [shape = 'u32[144,128]{1,0:T(1,128)}', space=vmem, size = 0x12000, scoped, tag = 'internal scratch']
  %s0 = inlined_call_operand.vmem [shape: f32[2,7,256], index: 0, kind: input, shape index: {}]
  %s1 = inlined_call_operand.vmem [shape: s32[2,1,256], index: 1, kind: input, shape index: {}]
  %s2 = inlined_call_operand.vmem [shape: f32[2,7,128], index: 2, kind: output, shape index: {0}]
  %s3 = inlined_call_operand.vmem [shape: f32[2,7,128], index: 3, kind: output, shape index: {1}]
  %s4 = inlined_call_operand.vmem [shape: f32[2,7,128], index: 4, kind: output, shape index: {2}]
  %s5 = inlined_call_operand.vmem [shape: f32[2,1,128], index: 5, kind: output, shape index: {3}]
  %6 = xla_tuple %s2, %s3, %s4, %s5
  %s7 = sld [smem:[#allocation0]]
  $region69: #{compute_losses.1} parent=0
    _
  %s9 = ssub.s32 1, %s7
  %s10 = scalar_select 0, %s9, %s7
  loop: start=0, step=1, limit=4
  $region2: #{compute_losses.1} parent=0 // loop_pre_header
    _
  $region3: #{compute_losses.1} parent=0 // loop_header
    %s12 = sphi 0, %s16
    %p13 = scmp.ge.s32.totalorder %s12, 4
    %s19 = sphi 0, %s31
    %s20 = sphi 0, %s27
    %s21 = sphi 0, %s19
    %s22 = sphi 0, %s20
    %s23 = sphi 0, %s21
    %s24 = sphi 0, %s22
    %s36 = sphi 0, %s38
    %s39 = sphi 0, %s36
    %s40 = sphi 0, %s39
    %s56 = sphi 0, %s40
    %s64 = sphi 0, %s66
    %s67 = sphi 0, %s64
    %s68 = sphi 0, %s67
    %s84 = sphi 0, %s68
    %s90 = sphi 0, %s92
    %s93 = sphi 0, %s90
    %s94 = sphi 0, %s93
    %s110 = sphi 0, %s94
    %s116 = sphi 0, %s118
    %s119 = sphi 0, %s116
    %s120 = sphi 0, %s119
    %s136 = sphi 0, %s120
    %s142 = sphi 0, %s144
    %s145 = sphi 0, %s142
    %s146 = sphi 0, %s145
    %s162 = sphi 0, %s146
    %s168 = sphi 0, %s170
    %s171 = sphi 0, %s168
    %s172 = sphi 0, %s171
    %s188 = sphi 0, %s172
  $region4: #{compute_losses.1} parent=0 // loop_header_branch
    %15 = sbr.rel (%p13) target = $region8
  $region5: #{compute_losses.1} parent=0 // loop_body
    %s17 = ssub.s32 %s12, 1
    %s18 = ssub.s32 %s12, 2
    %s25 = sadd.s32 1, %s20
    %p26 = scmp.ge.s32.totalorder %s25, 1
    %s27 = scalar_select %p26, 0, %s25
    %s28 = sadd.s32 1, %s19
    %s29 = scalar_select %p26, %s28, %s19
    %p30 = scmp.ge.s32.totalorder %s29, 2
    %s31 = scalar_select %p30, 0, %s29
    %s32 = ssub.s32 %s19, %s31
    %s33 = ssub.s32 %s20, %s27
    %s34 = sor.u32 %s32, %s33
    %p35 = scmp.eq.s32.totalorder %s34, 0
    %s37 = sadd.s32 %s36, 1
    %s38 = scalar_select %p35, %s36, %s37
    %p41 = pneg %p35
    %p42 = scmp.eq.s32.totalorder %s12, 1
    %p43 = por %p41, %p42
    %p44 = scmp.ne.s32.totalorder %s36, %s39
    %p45 = scmp.eq.s32.totalorder %s12, 0
    %p46 = por %p44, %p45
    %p47 = scmp.ne.s32.totalorder %s36, %s39
    %p48 = scmp.eq.s32.totalorder %s17, 1
    %p49 = por %p47, %p48
    %p50 = scmp.ne.s32.totalorder %s39, %s40
    %p51 = scmp.eq.s32.totalorder %s17, 0
    %p52 = por %p50, %p51
    %p53 = scmp.ne.s32.totalorder %s39, %s40
    %p54 = scmp.eq.s32.totalorder %s18, 1
    %p55 = por %p53, %p54
    %p57 = scmp.ne.s32.totalorder %s40, %s56
    %p58 = scmp.eq.s32.totalorder %s18, 0
    %p59 = por %p57, %p58
    %s60 = ssub.s32 %s19, %s31
    %s61 = ssub.s32 %s20, %s27
    %s62 = sor.u32 %s60, %s61
    %p63 = scmp.eq.s32.totalorder %s62, 0
    %s65 = sadd.s32 %s64, 1
    %s66 = scalar_select %p63, %s64, %s65
    %p69 = pneg %p63
    %p70 = scmp.eq.s32.totalorder %s12, 1
    %p71 = por %p69, %p70
    %p72 = scmp.ne.s32.totalorder %s64, %s67
    %p73 = scmp.eq.s32.totalorder %s12, 0
    %p74 = por %p72, %p73
    %p75 = scmp.ne.s32.totalorder %s64, %s67
    %p76 = scmp.eq.s32.totalorder %s17, 1
    %p77 = por %p75, %p76
    %p78 = scmp.ne.s32.totalorder %s67, %s68
    %p79 = scmp.eq.s32.totalorder %s17, 0
    %p80 = por %p78, %p79
    %p81 = scmp.ne.s32.totalorder %s67, %s68
    %p82 = scmp.eq.s32.totalorder %s18, 1
    %p83 = por %p81, %p82
    %p85 = scmp.ne.s32.totalorder %s68, %s84
    %p86 = scmp.eq.s32.totalorder %s18, 0
    %p87 = por %p85, %p86
    %s88 = ssub.s32 %s19, %s31
    %p89 = scmp.eq.s32.totalorder %s88, 0
    %s91 = sadd.s32 %s90, 1
    %s92 = scalar_select %p89, %s90, %s91
    %p95 = pneg %p89
    %p96 = scmp.eq.s32.totalorder %s12, 1
    %p97 = por %p95, %p96
    %p98 = scmp.ne.s32.totalorder %s90, %s93
    %p99 = scmp.eq.s32.totalorder %s12, 0
    %p100 = por %p98, %p99
    %p101 = scmp.ne.s32.totalorder %s90, %s93
    %p102 = scmp.eq.s32.totalorder %s17, 1
    %p103 = por %p101, %p102
    %p104 = scmp.ne.s32.totalorder %s93, %s94
    %p105 = scmp.eq.s32.totalorder %s17, 0
    %p106 = por %p104, %p105
    %p107 = scmp.ne.s32.totalorder %s93, %s94
    %p108 = scmp.eq.s32.totalorder %s18, 1
    %p109 = por %p107, %p108
    %p111 = scmp.ne.s32.totalorder %s94, %s110
    %p112 = scmp.eq.s32.totalorder %s18, 0
    %p113 = por %p111, %p112
    %s114 = ssub.s32 %s19, %s31
    %p115 = scmp.eq.s32.totalorder %s114, 0
    %s117 = sadd.s32 %s116, 1
    %s118 = scalar_select %p115, %s116, %s117
    %p121 = pneg %p115
    %p122 = scmp.eq.s32.totalorder %s12, 1
    %p123 = por %p121, %p122
    %p124 = scmp.ne.s32.totalorder %s116, %s119
    %p125 = scmp.eq.s32.totalorder %s12, 0
    %p126 = por %p124, %p125
    %p127 = scmp.ne.s32.totalorder %s116, %s119
    %p128 = scmp.eq.s32.totalorder %s17, 1
    %p129 = por %p127, %p128
    %p130 = scmp.ne.s32.totalorder %s119, %s120
    %p131 = scmp.eq.s32.totalorder %s17, 0
    %p132 = por %p130, %p131
    %p133 = scmp.ne.s32.totalorder %s119, %s120
    %p134 = scmp.eq.s32.totalorder %s18, 1
    %p135 = por %p133, %p134
    %p137 = scmp.ne.s32.totalorder %s120, %s136
    %p138 = scmp.eq.s32.totalorder %s18, 0
    %p139 = por %p137, %p138
    %s140 = ssub.s32 %s19, %s31
    %p141 = scmp.eq.s32.totalorder %s140, 0
    %s143 = sadd.s32 %s142, 1
    %s144 = scalar_select %p141, %s142, %s143
    %p147 = pneg %p141
    %p148 = scmp.eq.s32.totalorder %s12, 1
    %p149 = por %p147, %p148
    %p150 = scmp.ne.s32.totalorder %s142, %s145
    %p151 = scmp.eq.s32.totalorder %s12, 0
    %p152 = por %p150, %p151
    %p153 = scmp.ne.s32.totalorder %s142, %s145
    %p154 = scmp.eq.s32.totalorder %s17, 1
    %p155 = por %p153, %p154
    %p156 = scmp.ne.s32.totalorder %s145, %s146
    %p157 = scmp.eq.s32.totalorder %s17, 0
    %p158 = por %p156, %p157
    %p159 = scmp.ne.s32.totalorder %s145, %s146
    %p160 = scmp.eq.s32.totalorder %s18, 1
    %p161 = por %p159, %p160
    %p163 = scmp.ne.s32.totalorder %s146, %s162
    %p164 = scmp.eq.s32.totalorder %s18, 0
    %p165 = por %p163, %p164
    %s166 = ssub.s32 %s19, %s31
    %p167 = scmp.eq.s32.totalorder %s166, 0
    %s169 = sadd.s32 %s168, 1
    %s170 = scalar_select %p167, %s168, %s169
    %p173 = pneg %p167
    %p174 = scmp.eq.s32.totalorder %s12, 1
    %p175 = por %p173, %p174
    %p176 = scmp.ne.s32.totalorder %s168, %s171
    %p177 = scmp.eq.s32.totalorder %s12, 0
    %p178 = por %p176, %p177
    %p179 = scmp.ne.s32.totalorder %s168, %s171
    %p180 = scmp.eq.s32.totalorder %s17, 1
    %p181 = por %p179, %p180
    %p182 = scmp.ne.s32.totalorder %s171, %s172
    %p183 = scmp.eq.s32.totalorder %s17, 0
    %p184 = por %p182, %p183
    %p185 = scmp.ne.s32.totalorder %s171, %s172
    %p186 = scmp.eq.s32.totalorder %s18, 1
    %p187 = por %p185, %p186
    %p189 = scmp.ne.s32.totalorder %s172, %s188
    %p190 = scmp.eq.s32.totalorder %s18, 0
    %p191 = por %p189, %p190
    %p192 = scmp.le.s32.totalorder 1, %s12
    %p193 = scmp.lt.s32.totalorder %s12, 3
    %p194 = pnand %p192, %p193
    %p195 = pneg %p194
    // Predicated region
    $region9: #{compute_losses.1} parent=5 // pred_check
      _
    $region10: #{compute_losses.1} parent=5 // pred_check_branch
      %197 = sbr.rel (%p194) target = $region12
    $region11: #{compute_losses.1} parent=5 // pred_region
      %s198 = ssub.s32 %s12, 1
    $region12: #{compute_losses.1} parent=5 // pred_fallthru
      _
    %p199 = scmp.lt.s32.totalorder %s12, 2
    // Predicated region
    $region13: #{compute_losses.1} parent=5 // pred_check
      %p200 = pneg %p199
    $region14: #{compute_losses.1} parent=5 // pred_check_branch
      %202 = sbr.rel (%p200) target = $region16
    $region15: #{compute_losses.1} parent=5 // pred_region
      // Predicated region
      $region17: #{compute_losses.1} parent=15 // pred_check
        %p203 = pneg %p46
      $region18: #{compute_losses.1} parent=15 // pred_check_branch
        %205 = sbr.rel (%p203) target = $region20
      $region19: #{compute_losses.1} parent=15 // pred_region
        %s206 = smul.u32 2, %s20
        %p207 = scmp.lt.s32.totalorder %s19, 1
        %s208 = scalar_select %p207, %s19, 1
        %p209 = scmp.lt.s32.totalorder %s206, 1
        %s210 = scalar_select %p209, %s206, 1
        %s211 = smul.addr %s208, 2
        %s212 = sadd.s32 %s210, %s211
        %s213 = smul.addr %s212, 8
        %s214 = scalar_lea.vmem %s0, %s213
        %s215 = smul.u32 2, %s20
      $region20: #{compute_losses.1} parent=15 // pred_fallthru
        _
      // Predicated region
      $region21: #{compute_losses.1} parent=15 // pred_check
        %p216 = pneg %p74
      $region22: #{compute_losses.1} parent=15 // pred_check_branch
        %218 = sbr.rel (%p216) target = $region24
      $region23: #{compute_losses.1} parent=15 // pred_region
        %s219 = smul.u32 2, %s20
        %p220 = scmp.lt.s32.totalorder %s19, 1
        %s221 = scalar_select %p220, %s19, 1
        %p222 = scmp.lt.s32.totalorder %s219, 1
        %s223 = scalar_select %p222, %s219, 1
        %s224 = smul.addr %s221, 2
        %s225 = sadd.s32 %s223, %s224
        %s226 = scalar_lea.vmem %s1, %s225
        %s227 = smul.u32 2, %s20
      $region24: #{compute_losses.1} parent=15 // pred_fallthru
        _
    $region16: #{compute_losses.1} parent=5 // pred_fallthru
      _
    %p228 = scmp.le.s32.totalorder 1, %s12
    %p229 = scmp.lt.s32.totalorder %s12, 3
    %p230 = pnand %p228, %p229
    %p231 = pneg %p230
    // Predicated region
    $region25: #{compute_losses.1} parent=5 // pred_check
      _
    $region26: #{compute_losses.1} parent=5 // pred_check_branch
      %233 = sbr.rel (%p230) target = $region28
    $region27: #{compute_losses.1} parent=5 // pred_region
      %s234 = ssub.s32 %s12, 1
      %s235 = smul.u32 2, %s22
      %p236 = scmp.lt.s32.totalorder %s21, 1
      %s237 = scalar_select %p236, %s21, 1
      %p238 = scmp.lt.s32.totalorder %s235, 1
      %s239 = scalar_select %p238, %s235, 1
      %s240 = smul.addr %s237, 2
      %s241 = sadd.s32 %s239, %s240
      %s242 = smul.addr %s241, 8
      %s243 = scalar_lea.vmem %s0, %s242
      %p244 = pneg %p52
      %p245 = pneg %p49
      %s246 = smul.u32 2, %s22
      %p247 = scmp.lt.s32.totalorder %s21, 1
      %s248 = scalar_select %p247, %s21, 1
      %p249 = scmp.lt.s32.totalorder %s246, 1
      %s250 = scalar_select %p249, %s246, 1
      %s251 = smul.addr %s248, 2
      %s252 = sadd.s32 %s250, %s251
      %s253 = scalar_lea.vmem %s1, %s252
      %p254 = pneg %p80
      %p255 = pneg %p77
      %p256 = pneg %p106
      %p257 = pneg %p103
      %p258 = scmp.lt.s32.totalorder %s21, 1
      %s259 = scalar_select %p258, %s21, 1
      %s260 = smul.addr %s259, 8
      %s261 = scalar_lea.vmem %s2, %s260
      %p262 = pneg %p132
      %p263 = pneg %p129
      %p264 = scmp.lt.s32.totalorder %s21, 1
      %s265 = scalar_select %p264, %s21, 1
      %s266 = smul.addr %s265, 8
      %s267 = scalar_lea.vmem %s3, %s266
      %p268 = pneg %p158
      %p269 = pneg %p155
      %p270 = scmp.lt.s32.totalorder %s21, 1
      %s271 = scalar_select %p270, %s21, 1
      %s272 = smul.addr %s271, 8
      %s273 = scalar_lea.vmem %s4, %s272
      %p274 = pneg %p184
      %p275 = pneg %p181
      %p276 = scmp.lt.s32.totalorder %s21, 1
      %s277 = scalar_select %p276, %s21, 1
      %s278 = scalar_lea.vmem %s5, %s277
      %s279 = smul.u32 2, %s22
      %p280 = scmp.lt.s32.totalorder %s21, 1
      %s281 = scalar_select %p280, %s21, 1
      %p282 = scmp.lt.s32.totalorder %s279, 1
      %s283 = scalar_select %p282, %s279, 1
      %s284 = smul.addr %s281, 2
      %s285 = sadd.s32 %s283, %s284
      %s286 = smul.addr %s285, 8
      %s287 = scalar_lea.vmem %s0, %s286
      %s288 = smul.u32 2, %s22
      %s289 = smul.u32 2, %s22
      %p290 = scmp.lt.s32.totalorder %s21, 1
      %s291 = scalar_select %p290, %s21, 1
      %p292 = scmp.lt.s32.totalorder %s289, 1
      %s293 = scalar_select %p292, %s289, 1
      %s294 = smul.addr %s291, 2
      %s295 = sadd.s32 %s293, %s294
      %s296 = scalar_lea.vmem %s1, %s295
      %s297 = smul.u32 2, %s22
      %p298 = scmp.lt.s32.totalorder %s21, 1
      %s299 = scalar_select %p298, %s21, 1
      %s300 = smul.addr %s299, 8
      %s301 = scalar_lea.vmem %s2, %s300
      %p302 = scmp.lt.s32.totalorder %s21, 1
      %s303 = scalar_select %p302, %s21, 1
      %s304 = smul.addr %s303, 8
      %s305 = scalar_lea.vmem %s3, %s304
      %p306 = scmp.lt.s32.totalorder %s21, 1
      %s307 = scalar_select %p306, %s21, 1
      %s308 = smul.addr %s307, 8
      %s309 = scalar_lea.vmem %s4, %s308
      %p310 = scmp.lt.s32.totalorder %s21, 1
      %s311 = scalar_select %p310, %s21, 1
      %s312 = scalar_lea.vmem %s5, %s311
      %p313 = scmp.eq.s32.totalorder %s22, 0
      // Predicated region
      $region29: #{compute_losses.1} parent=27 // pred_check
        %p314 = pneg %p313
      $region30: #{compute_losses.1} parent=27 // pred_check_branch
        %316 = sbr.rel (%p314) target = $region32
      $region31: #{compute_losses.1} parent=27 // pred_region
        %317 = vst [vmem:[%s301] sm:$0x7f] 0.0
        %318 = vst [vmem:[%s305] sm:$0x7f] 0.0
        %319 = vst [vmem:[%s309] sm:$0x7f] 0.0
        %320 = vst [vmem:[%s312] sm:$0x1] 0.0
      $region32: #{compute_losses.1} parent=27 // pred_fallthru
        _
      %v321 = vld [vmem:[%s287] sm:$0x7f]
      %v322 = vld [vmem:[%s287 + $0x8] sm:$0x7f]
      %v323 = vld [vmem:[%s296] sm:$0x3]
      %v324 = vlaneseq
      %v325 = vshrl.u32 %v324, 7
      %v326 = vlaneseq
      %v327 = vshrl.u32 %v326, 7
      %v328 = vsub.s32 0, %v327
      %v329 = vrot.slane %v323, %v328
      %v330 = vlaneseq
      %v331 = vshrl.u32 %v330, 7
      %v332 = vsub.s32 1, %v331
      %v333 = vrot.slane %v323, %v332
      %vm334 = vcmp.eq.s32.totalorder %v325, %v329
      %vm335 = vcmp.eq.s32.totalorder %v325, %v333
      %v336 = vsel %vm334, 1, 0
      %v337 = vsel %vm335, 1, 0
      %v338 = vcvt.s32.f32 %v336
      %v339 = vcvt.s32.f32 %v337
      %vm340 = vcmask 1046528
      %v341 = vsel %vm340, %v321, -inf
      %v342 = vrot.slane %v341, 4
      %v343 = vmax.f32 %v341, %v342
      %v344 = vrot.slane %v343, 2
      %v345 = vmax.f32 %v343, %v344
      %v346 = vrot.slane %v345, 1
      %v347 = vmax.f32 %v345, %v346
      %v348 = vsel %vm340, %v322, -inf
      %v349 = vrot.slane %v348, 4
      %v350 = vmax.f32 %v348, %v349
      %v351 = vrot.slane %v350, 2
      %v352 = vmax.f32 %v350, %v351
      %v353 = vrot.slane %v352, 1
      %v354 = vmax.f32 %v352, %v353
      %v355 = vsub.f32 %v321, %v347
      %v356 = vsub.f32 %v322, %v354
      %v357 = vmul.f32 %v355, 1.442695
      %v358 = vpow.pop %v357
      %v359 = vmul.f32 %v356, 1.442695
      %v360 = vpow.pop %v359
      %v361 = vsel %vm340, %v358, 0.0
      %v362 = vrot.slane %v361, 4
      %v363 = vadd.f32 %v361, %v362
      %v364 = vrot.slane %v363, 2
      %v365 = vadd.f32 %v363, %v364
      %v366 = vrot.slane %v365, 1
      %v367 = vadd.f32 %v365, %v366
      %v368 = vsel %vm340, %v360, 0.0
      %v369 = vrot.slane %v368, 4
      %v370 = vadd.f32 %v368, %v369
      %v371 = vrot.slane %v370, 2
      %v372 = vadd.f32 %v370, %v371
      %v373 = vrot.slane %v372, 1
      %v374 = vadd.f32 %v372, %v373
      %v375 = vrcp.pop %v367
      %v376 = vrcp.pop %v374
      %v377 = vmul.f32 %v358, %v375
      %v378 = vmul.f32 %v360, %v376
      %v379 = vlog2.pop %v367
      %v380 = vmul.f32 %v379, 0.6931472
      %v381 = vlog2.pop %v374
      %v382 = vmul.f32 %v381, 0.6931472
      %v383 = vadd.f32 %v347, %v380
      %v384 = vadd.f32 %v354, %v382
      %v385 = vmul.f32 %v338, %v321
      %v386 = vmul.f32 %v339, %v322
      %v387 = vsel %vm340, %v385, 0.0
      %v388 = vrot.slane %v387, 4
      %v389 = vadd.f32 %v387, %v388
      %v390 = vrot.slane %v389, 2
      %v391 = vadd.f32 %v389, %v390
      %v392 = vrot.slane %v391, 1
      %v393 = vadd.f32 %v391, %v392
      %v394 = vsel %vm340, %v386, 0.0
      %v395 = vrot.slane %v394, 4
      %v396 = vadd.f32 %v394, %v395
      %v397 = vrot.slane %v396, 2
      %v398 = vadd.f32 %v396, %v397
      %v399 = vrot.slane %v398, 1
      %v400 = vadd.f32 %v398, %v399
      %vm401 = vcmp.eq.s32.totalorder %v323, 0
      %v402 = vsel %vm401, 3.177941, 0.0
      %vm403 = vcmp.eq.s32.totalorder %v323, 1
      %v404 = vsel %vm403, 2.5617616, 0.0
      %v405 = vadd.f32 %v402, %v404
      %vm406 = vcmp.eq.s32.totalorder %v323, 2
      %v407 = vsel %vm406, 23.644938, 0.0
      %v408 = vadd.f32 %v405, %v407
      %vm409 = vcmp.eq.s32.totalorder %v323, 3
      %v410 = vsel %vm409, 7.092984, 0.0
      %v411 = vadd.f32 %v408, %v410
      %vm412 = vcmp.eq.s32.totalorder %v323, 4
      %v413 = vsel %vm412, 45.14709, 0.0
      %v414 = vadd.f32 %v411, %v413
      %vm415 = vcmp.eq.s32.totalorder %v323, 5
      %v416 = vsel %vm415, 18.772142, 0.0
      %v417 = vadd.f32 %v414, %v416
      %vm418 = vcmp.eq.s32.totalorder %v323, 6
      %v419 = vsel %vm418, 48.18802, 0.0
      %v420 = vadd.f32 %v417, %v419
      %v421 = vsub.f32 %v383, %v393
      %v422 = vsub.f32 %v384, %v400
      %v425 = vcombine.low %v421, %v422
      %v427 = vunpack.c.l.s4 1966171168
      %v428 = vunpack.c.0.s8 %v427
      %v429 = vlaneseq
      %v430 = vshrl.u32 %v429, 7
      %v431 = vsub.s32 %v428, %v430
      %v432 = vrot.slane %v425, %v431
      %v434 = vunpack.c.l.s4 1966171168
      %v435 = vunpack.c.0.s8 %v434
      %v436 = vlaneseq
      %v437 = vshrl.u32 %v436, 7
      %v438 = vsub.s32 %v435, %v437
      %v439 = vrot.slane %v432, %v438
      %v441 = vmul.f32 %v420, %v439
      %v442 = vmul.f32 %v377, %v338
      %v443 = vmul.f32 %v378, %v339
      %v444 = vld [vmem:[%s301] sm:$0x7f]
      %v445 = vadd.f32 %v442, %v443
      %v446 = vadd.f32 %v444, %v445
      %447 = vst [vmem:[%s301] sm:$0x7f] %v446
      %v448 = vld [vmem:[%s305] sm:$0x7f]
      %v449 = vadd.f32 %v377, %v378
      %v450 = vadd.f32 %v448, %v449
      %451 = vst [vmem:[%s305] sm:$0x7f] %v450
      %v452 = vld [vmem:[%s309] sm:$0x7f]
      %v453 = vadd.f32 %v338, %v339
      %v454 = vadd.f32 %v452, %v453
      %455 = vst [vmem:[%s309] sm:$0x7f] %v454
      %v456 = vld [vmem:[%s312] sm:$0x1]
      %v458 = vrot.slane %v441, 1
      %v460 = vadd.f32 %v441, %v458
      %v461 = vadd.f32 %v456, %v460
      %462 = vst [vmem:[%s312] sm:$0x1] %v461
      %p463 = scmp.lt.s32.totalorder %s21, 1
      %s464 = scalar_select %p463, %s21, 1
      %s465 = smul.addr %s464, 8
      %s466 = scalar_lea.vmem %s2, %s465
      %p467 = scmp.lt.s32.totalorder %s21, 1
      %s468 = scalar_select %p467, %s21, 1
      %s469 = smul.addr %s468, 8
      %s470 = scalar_lea.vmem %s3, %s469
      %p471 = scmp.lt.s32.totalorder %s21, 1
      %s472 = scalar_select %p471, %s21, 1
      %s473 = smul.addr %s472, 8
      %s474 = scalar_lea.vmem %s4, %s473
      %p475 = scmp.lt.s32.totalorder %s21, 1
      %s476 = scalar_select %p475, %s21, 1
      %s477 = scalar_lea.vmem %s5, %s476
      // Predicated region
      $region33: #{compute_losses.1} parent=27 // pred_check
        %p478 = pneg %p103
      $region34: #{compute_losses.1} parent=27 // pred_check_branch
        %480 = sbr.rel (%p478) target = $region36
      $region35: #{compute_losses.1} parent=27 // pred_region
        _
      $region36: #{compute_losses.1} parent=27 // pred_fallthru
        _
      // Predicated region
      $region37: #{compute_losses.1} parent=27 // pred_check
        %p481 = pneg %p129
      $region38: #{compute_losses.1} parent=27 // pred_check_branch
        %483 = sbr.rel (%p481) target = $region40
      $region39: #{compute_losses.1} parent=27 // pred_region
        _
      $region40: #{compute_losses.1} parent=27 // pred_fallthru
        _
      // Predicated region
      $region41: #{compute_losses.1} parent=27 // pred_check
        %p484 = pneg %p155
      $region42: #{compute_losses.1} parent=27 // pred_check_branch
        %486 = sbr.rel (%p484) target = $region44
      $region43: #{compute_losses.1} parent=27 // pred_region
        _
      $region44: #{compute_losses.1} parent=27 // pred_fallthru
        _
      // Predicated region
      $region45: #{compute_losses.1} parent=27 // pred_check
        %p487 = pneg %p181
      $region46: #{compute_losses.1} parent=27 // pred_check_branch
        %489 = sbr.rel (%p487) target = $region48
      $region47: #{compute_losses.1} parent=27 // pred_region
        _
      $region48: #{compute_losses.1} parent=27 // pred_fallthru
        _
    $region28: #{compute_losses.1} parent=5 // pred_fallthru
      _
    %p490 = scmp.le.s32.totalorder 2, %s12
    // Predicated region
    $region49: #{compute_losses.1} parent=5 // pred_check
      %p491 = pneg %p490
    $region50: #{compute_losses.1} parent=5 // pred_check_branch
      %493 = sbr.rel (%p491) target = $region52
    $region51: #{compute_losses.1} parent=5 // pred_region
      %s494 = ssub.s32 %s12, 2
      // Predicated region
      $region53: #{compute_losses.1} parent=51 // pred_check
        %p495 = pneg %p109
      $region54: #{compute_losses.1} parent=51 // pred_check_branch
        %497 = sbr.rel (%p495) target = $region56
      $region55: #{compute_losses.1} parent=51 // pred_region
        %p498 = scmp.lt.s32.totalorder %s23, 1
        %s499 = scalar_select %p498, %s23, 1
        %s500 = smul.addr %s499, 8
        %s501 = scalar_lea.vmem %s2, %s500
      $region56: #{compute_losses.1} parent=51 // pred_fallthru
        _
      // Predicated region
      $region57: #{compute_losses.1} parent=51 // pred_check
        %p502 = pneg %p135
      $region58: #{compute_losses.1} parent=51 // pred_check_branch
        %504 = sbr.rel (%p502) target = $region60
      $region59: #{compute_losses.1} parent=51 // pred_region
        %p505 = scmp.lt.s32.totalorder %s23, 1
        %s506 = scalar_select %p505, %s23, 1
        %s507 = smul.addr %s506, 8
        %s508 = scalar_lea.vmem %s3, %s507
      $region60: #{compute_losses.1} parent=51 // pred_fallthru
        _
      // Predicated region
      $region61: #{compute_losses.1} parent=51 // pred_check
        %p509 = pneg %p161
      $region62: #{compute_losses.1} parent=51 // pred_check_branch
        %511 = sbr.rel (%p509) target = $region64
      $region63: #{compute_losses.1} parent=51 // pred_region
        %p512 = scmp.lt.s32.totalorder %s23, 1
        %s513 = scalar_select %p512, %s23, 1
        %s514 = smul.addr %s513, 8
        %s515 = scalar_lea.vmem %s4, %s514
      $region64: #{compute_losses.1} parent=51 // pred_fallthru
        _
      // Predicated region
      $region65: #{compute_losses.1} parent=51 // pred_check
        %p516 = pneg %p187
      $region66: #{compute_losses.1} parent=51 // pred_check_branch
        %518 = sbr.rel (%p516) target = $region68
      $region67: #{compute_losses.1} parent=51 // pred_region
        %p519 = scmp.lt.s32.totalorder %s23, 1
        %s520 = scalar_select %p519, %s23, 1
        %s521 = scalar_lea.vmem %s5, %s520
      $region68: #{compute_losses.1} parent=51 // pred_fallthru
        _
    $region52: #{compute_losses.1} parent=5 // pred_fallthru
      _
  $region6: #{compute_losses.1} parent=0 // loop_footer
    %s16 = sadd.s32 1, %s12
  $region7: #{compute_losses.1} parent=0 // loop_footer_branch
    %11 = sbr.rel target = $region3
  $region8: #{compute_losses.1} parent=0 // loop_exit
    _

</llo_original>
